<compile_context>
chip_gen: v7x
topology: tpu7x:2x2x1
jax: 0.10.0
libtpu: 0.0.40
codegen_flags: <defaults>
</compile_context>

<pallas_src>
from functools import partial

import jax
import jax.numpy as jnp
from jax.experimental import pallas as pl
from jax.experimental.pallas import tpu as pltpu


def _flce_kernel(*refs, tv, vocab, ignore_index, label_smoothing, logit_scale,
                 has_bias, needs_vmask):
    if has_bias:
        x_ref, w_ref, b_ref, tgt_ref, loss_ref = refs[:5]
        scratch = refs[5:]
    else:
        x_ref, w_ref, tgt_ref, loss_ref = refs[:4]
        b_ref = None
        scratch = refs[4:]

    if label_smoothing > 0.0:
        m_sc, l_sc, ty_sc, z_sc = scratch
    else:
        m_sc, l_sc, ty_sc = scratch
        z_sc = None

    j = pl.program_id(1)
    nv = pl.num_programs(1)

    @pl.when(j == 0)
    def _():
        m_sc[...] = jnp.full_like(m_sc, -jnp.inf)
        l_sc[...] = jnp.zeros_like(l_sc)
        ty_sc[...] = jnp.zeros_like(ty_sc)
        if z_sc is not None:
            z_sc[...] = jnp.zeros_like(z_sc)

    # logits tile (tn, tv): contract the H axis of x (tn, H) against the H axis
    # of the un-transposed weight tile (tv, H) directly on the MXU.
    logits = jax.lax.dot_general(
        x_ref[...], w_ref[...],
        dimension_numbers=(((1,), (1,)), ((), ())),
        preferred_element_type=jnp.float32)
    if has_bias:
        logits = logits + b_ref[...].astype(jnp.float32)
    if logit_scale != 1.0:
        logits = logits * logit_scale

    col = j * tv + jax.lax.broadcasted_iota(jnp.int32, logits.shape, 1)
    if needs_vmask:
        # Mask padded vocab columns AFTER bias/scale so OOB weight/bias reads
        # in the padded tail never contribute.
        valid = col < vocab
        logits = jnp.where(valid, logits, -jnp.inf)

    # Online logsumexp over the vocab axis.
    m_prev = m_sc[...]
    m_new = jnp.maximum(m_prev, logits.max(axis=-1, keepdims=True))
    l_sc[...] = (l_sc[...] * jnp.exp(m_prev - m_new)
                 + jnp.exp(logits - m_new).sum(axis=-1, keepdims=True))
    m_sc[...] = m_new

    # Gather the (scaled) logit at the target index for each row.  Rows whose
    # target equals ignore_index are masked to zero in the epilogue, so both
    # negative and in-range ignore_index values are handled.
    tgt = tgt_ref[...]  # (tn, 1) int32
    hit = col == tgt
    ty_sc[...] += jnp.sum(jnp.where(hit, logits, 0.0), axis=-1, keepdims=True)

    if z_sc is not None:
        eps = label_smoothing / vocab
        z_logits = jnp.where(valid, logits, 0.0) if needs_vmask else logits
        z_sc[...] += jnp.sum(-eps * z_logits, axis=-1, keepdims=True)

    @pl.when(j == nv - 1)
    def _():
        lse = m_sc[...] + jnp.log(l_sc[...])
        loss = lse - ty_sc[...]
        if z_sc is not None:
            loss = loss * (1.0 - label_smoothing) + (z_sc[...]
                                                     + label_smoothing * lse)
        loss_ref[...] = jnp.where(tgt == ignore_index, 0.0, loss)


def _round_up(v, m):
    return -(-v // m) * m


def _clamp_tn(tn, N):
    """Row tile: full rows if they cover N, else a multiple of 8 (sublanes)."""
    tn = max(1, min(tn, N))
    if tn == N:
        return tn
    tn = (tn // 8) * 8
    return N if tn < 8 else tn


def _clamp_tv(tv, V):
    """Vocab tile: full vocab if it covers V, else a multiple of 128 (lanes)."""
    tv = max(1, min(tv, V))
    if tv == V:
        return tv
    tv = (tv // 128) * 128
    return V if tv < 128 else tv


def _vmem_need(tn, tv, H, ex, ew, n_scratch, has_bias):
    """VMEM footprint estimate, including the f32 logits-tile temporaries."""
    h_pad = _round_up(H, 128)
    tv_pad = _round_up(tv, 128)
    need = (2 * tn * h_pad * ex                       # x double buffer
            + 2 * tv * h_pad * ew                     # weight double buffer
            + (2 * 8 * tv_pad * 4 if has_bias else 0)  # bias (1,tv) -> (8,tv)
            + 2 * tn * 128 * 4                        # target (tn,1) lane-padded
            + 2 * tn * 128 * 4                        # per-row loss output
            + n_scratch * tn * 128 * 4                # online-LSE accumulators
            + 3 * tn * tv_pad * 4)                    # f32 logits + exp/where temps
    return need


def _auto_tiles(N, V, H, ex, ew, n_scratch, has_bias, vmem_cap):
    """Pick (tn, tv): prioritize tn (weight HBM traffic ~ 1/tn), then tv."""
    big = vmem_cap > 80 * 2 ** 20            # 128 MiB parts (v5e / v6e)
    budget = int(vmem_cap * (0.80 if big else 0.78))
    tn_pref = ([1024, 768, 512, 384, 256, 128, 64, 32, 16, 8] if big
               else [512, 384, 256, 128, 64, 32, 16, 8])   # v7x: 64 MiB/TC
    tv_pref = [2048, 1024, 512, 256, 128] if big else [1024, 512, 256, 128]
    for tn in tn_pref:
        tnc = _clamp_tn(tn, N)
        for tv in tv_pref:
            tvc = _clamp_tv(tv, V)
            if _vmem_need(tnc, tvc, H, ex, ew, n_scratch, has_bias) <= budget:
                return tnc, tvc
    return _clamp_tn(8, N), _clamp_tv(128, V)


def fused_linear_cross_entropy_loss(x, target, weight, bias=None, *,
                                    ignore_index=-100, label_smoothing=0.0,
                                    logit_scale=1.0, reduction="mean",
                                    tn=None, tv=None):
    """x: [N, H], target: [N] int, weight: [V, H], bias: [V] or None."""
    assert reduction in ("mean", "sum")
    N, H = x.shape
    V = weight.shape[0]
    has_bias = bias is not None

    ex = jnp.dtype(x.dtype).itemsize
    ew = jnp.dtype(weight.dtype).itemsize
    n_scratch = 4 if label_smoothing > 0.0 else 3

    try:
        vmem_cap = int(pltpu.get_tpu_info().vmem_capacity_bytes)
    except Exception:
        vmem_cap = 128 * 2 ** 20
    big = vmem_cap > 80 * 2 ** 20

    if tn is None or tv is None:
        a_tn, a_tv = _auto_tiles(N, V, H, ex, ew, n_scratch, has_bias, vmem_cap)
        tn = a_tn if tn is None else _clamp_tn(tn, N)
        tv = a_tv if tv is None else _clamp_tv(tv, V)
    else:
        tn = _clamp_tn(tn, N)
        tv = _clamp_tv(tv, V)

    grid = (pl.cdiv(N, tn), pl.cdiv(V, tv))
    needs_vmask = (V % tv) != 0

    need = _vmem_need(tn, tv, H, ex, ew, n_scratch, has_bias)
    cap_hi = int(vmem_cap * (0.85 if big else 0.82))
    vmem_limit = int(min(max(int(need * 1.3), 32 * 2 ** 20), cap_hi))

    tgt2 = jnp.asarray(target, jnp.int32).reshape(N, 1)

    in_specs = [
        pl.BlockSpec((tn, H), lambda i, j: (i, 0)),   # x (resident over j)
        pl.BlockSpec((tv, H), lambda i, j: (j, 0)),   # weight [V, H], contiguous
    ]
    operands = [x, weight]
    if has_bias:
        b2 = jnp.asarray(bias, jnp.float32).reshape(1, V)
        in_specs.append(pl.BlockSpec((1, tv), lambda i, j: (0, j)))
        operands.append(b2)
    in_specs.append(pl.BlockSpec((tn, 1), lambda i, j: (i, 0)))   # target
    operands.append(tgt2)

    kernel = partial(_flce_kernel, tv=tv, vocab=V,
                     ignore_index=ignore_index,
                     label_smoothing=label_smoothing,
                     logit_scale=logit_scale,
                     has_bias=has_bias,
                     needs_vmask=needs_vmask)

    n_row_tiles = pl.cdiv(N, tn)
    cost = pl.CostEstimate(
        flops=2 * N * V * H,
        transcendentals=N * V,
        bytes_accessed=(N * H * ex + n_row_tiles * V * H * ew
                        + (V * 4 if has_bias else 0) + N * 4 * 2))

    loss_rows = pl.pallas_call(
        kernel,
        out_shape=jax.ShapeDtypeStruct((N, 1), jnp.float32),
        grid_spec=pltpu.PrefetchScalarGridSpec(
            num_scalar_prefetch=0,
            grid=grid,
            in_specs=in_specs,
            out_specs=pl.BlockSpec((tn, 1), lambda i, j: (i, 0)),
            scratch_shapes=[pltpu.VMEM((tn, 1), jnp.float32)] * n_scratch,
        ),
        compiler_params=pltpu.CompilerParams(
            dimension_semantics=("parallel", "arbitrary"),
            vmem_limit_bytes=vmem_limit),
        cost_estimate=cost,
    )(*operands)

    loss_sum = jnp.sum(loss_rows)
    if reduction == "mean":
        total = jnp.maximum(jnp.sum(target != ignore_index), 1)
        loss_sum = loss_sum / total.astype(jnp.float32)
    return loss_sum


def _reference_loss(x, target, weight, bias, *, ignore_index, label_smoothing,
                    logit_scale, reduction):
    xf = jnp.asarray(x, jnp.float32)
    wf = jnp.asarray(weight, jnp.float32)
    bf = (jnp.zeros((weight.shape[0],), jnp.float32) if bias is None
          else jnp.asarray(bias, jnp.float32))
    logits = (xf @ wf.T + bf) * logit_scale
    lse = jax.scipy.special.logsumexp(logits, axis=-1)
    valid = target != ignore_index
    total = valid.sum()
    safe_t = jnp.where(valid, target, 0)
    tl = jnp.take_along_axis(logits, safe_t[:, None], axis=-1)[:, 0]
    loss = lse - tl
    if label_smoothing > 0.0:
        eps = label_smoothing / logits.shape[-1]
        z = jnp.sum(-eps * logits, axis=-1)
        loss = loss * (1.0 - label_smoothing) + (z + label_smoothing * lse)
    loss = jnp.where(valid, loss, 0.0)
    loss = loss.sum()
    if reduction == "mean":
        loss = loss / jnp.maximum(total, 1).astype(jnp.float32)
    return loss


class FusedLinearCrossEntropyLoss:
    """JAX/Pallas counterpart of the PyTorch module (forward only)."""

    def __init__(self, ignore_index=-100, label_smoothing=0.0,
                 logit_scale=1.0, num_chunks=8, reduction="mean",
                 use_l2warp=False, l2_penalty_factor=1e-4,
                 tn=None, tv=None):
        assert reduction in ("mean", "sum")
        self.ignore_index = ignore_index
        self.label_smoothing = label_smoothing
        self.logit_scale = logit_scale
        self.reduction = reduction
        self.tn = tn
        self.tv = tv
        # num_chunks / use_l2warp / l2_penalty_factor only affect the saved
        # gradients in the reference implementation, not the forward loss.

    def __call__(self, x, target, weight, bias=None):
        # x: [B, S, H], target: [B, S]
        xf = x.reshape(-1, x.shape[-1])
        tf = target.reshape(-1)
        return fused_linear_cross_entropy_loss(
            xf, tf, weight, bias,
            ignore_index=self.ignore_index,
            label_smoothing=self.label_smoothing,
            logit_scale=self.logit_scale,
            reduction=self.reduction,
            tn=self.tn, tv=self.tv)


if __name__ == "__main__":
    B, S, H, V = 2, 8, 32, 1000   # N = 16; V not a multiple of the vocab tile
    key = jax.random.PRNGKey(0)
    kx, kw, kb, kt = jax.random.split(key, 4)

    # Keep x / weight in bf16 so the kernel exercises the bf16 MXU path.
    x = jax.random.normal(kx, (B, S, H), dtype=jnp.float32).astype(jnp.bfloat16)
    weight = (jax.random.normal(kw, (V, H), dtype=jnp.float32) * 0.05).astype(jnp.bfloat16)
    bias = jax.random.normal(kb, (V,), dtype=jnp.float32) * 0.05
    target = jax.random.randint(kt, (B, S), 0, V, dtype=jnp.int32)
    target = target.at[0, 0].set(-100)  # exercise ignore_index path

    # Case 1: mean reduction, no smoothing; small tiles to exercise multi-tile
    # rows, multi-tile vocab and the padded-vocab -inf masking path.
    mod1 = FusedLinearCrossEntropyLoss(ignore_index=-100, label_smoothing=0.0,
                                       logit_scale=1.0, reduction="mean",
                                       tn=8, tv=512)
    loss1 = jax.block_until_ready(mod1(x, target, weight, bias))
    ref1 = _reference_loss(x.reshape(-1, H), target.reshape(-1), weight, bias,
                           ignore_index=-100, label_smoothing=0.0,
                           logit_scale=1.0, reduction="mean")
    assert jnp.allclose(loss1, ref1, rtol=2e-3, atol=2e-3), (loss1, ref1)

    # Case 2: sum reduction, label smoothing, logit scale.
    mod2 = FusedLinearCrossEntropyLoss(ignore_index=-100, label_smoothing=0.1,
                                       logit_scale=0.5, reduction="sum",
                                       tn=8, tv=512)
    loss2 = jax.block_until_ready(mod2(x, target, weight, bias))
    ref2 = _reference_loss(x.reshape(-1, H), target.reshape(-1), weight, bias,
                           ignore_index=-100, label_smoothing=0.1,
                           logit_scale=0.5, reduction="sum")
    assert jnp.allclose(loss2, ref2, rtol=2e-3, atol=2e-3), (loss2, ref2)

    # Case 3: auto tile selection + no bias (exercises the bias-free operand
    # list and the per-chip VMEM-budgeted tiling).
    mod3 = FusedLinearCrossEntropyLoss(ignore_index=-100, label_smoothing=0.0,
                                       logit_scale=1.0, reduction="mean")
    loss3 = jax.block_until_ready(mod3(x, target, weight, None))
    ref3 = _reference_loss(x.reshape(-1, H), target.reshape(-1), weight, None,
                           ignore_index=-100, label_smoothing=0.0,
                           logit_scale=1.0, reduction="mean")
    assert jnp.allclose(loss3, ref3, rtol=2e-3, atol=2e-3), (loss3, ref3)

    # Case 4: N not a multiple of tn (padded last row tile writeback clipping).
    x4 = x[:, :7]
    t4 = target[:, :7]
    mod4 = FusedLinearCrossEntropyLoss(ignore_index=-100, label_smoothing=0.0,
                                       logit_scale=1.0, reduction="mean",
                                       tn=8, tv=512)
    loss4 = jax.block_until_ready(mod4(x4, t4, weight, bias))
    ref4 = _reference_loss(x4.reshape(-1, H), t4.reshape(-1), weight, bias,
                           ignore_index=-100, label_smoothing=0.0,
                           logit_scale=1.0, reduction="mean")
    assert jnp.allclose(loss4, ref4, rtol=2e-3, atol=2e-3), (loss4, ref4)

    print("KERNEL_OK")
</pallas_src>

<mosaic_0001>
module attributes {stable_mosaic.version = 11 : i64} {
  func.func @_flce_kernel(%arg0: i32, %arg1: i32, %arg2: memref<8x32xbf16, #tpu.memory_space<vmem>>, %arg3: memref<512x32xbf16, #tpu.memory_space<vmem>>, %arg4: memref<1x512xf32, #tpu.memory_space<vmem>>, %arg5: memref<8x1xi32, #tpu.memory_space<vmem>>, %arg6: memref<8x1xf32, #tpu.memory_space<vmem>>, %arg7: memref<8x1xf32, #tpu.memory_space<vmem>>, %arg8: memref<8x1xf32, #tpu.memory_space<vmem>>, %arg9: memref<8x1xf32, #tpu.memory_space<vmem>>) attributes {dimension_semantics = [#tpu.dimension_semantics<parallel>, #tpu.dimension_semantics<arbitrary>], iteration_bounds = array<i64: 2, 2>, scalar_prefetch = 0 : i64, scratch_operands = 3 : i64, tpu.core_type = #tpu.core_type<tc>, window_params = [{transform_indices = @transform_0, window_bounds = array<i64: 8, 32>}, {transform_indices = @transform_1, window_bounds = array<i64: 512, 32>}, {transform_indices = @transform_2, window_bounds = array<i64: 1, 512>}, {transform_indices = @transform_3, window_bounds = array<i64: 8, 1>}, {transform_indices = @transform_4, window_bounds = array<i64: 8, 1>}]} {
    %c0_i32 = arith.constant 0 : i32
    %0 = arith.cmpi eq, %arg1, %c0_i32 : i32
    %1 = arith.extui %0 : i1 to i32
    %c0_i32_0 = arith.constant 0 : i32
    %2 = arith.cmpi ne, %1, %c0_i32_0 : i32
    scf.if %2 {
      %cst_26 = arith.constant 0xFF800000 : f32
      %46 = vector.broadcast %cst_26 : f32 to vector<8x1xf32>
      %c0_27 = arith.constant 0 : index
      %c0_28 = arith.constant 0 : index
      %47 = vector.load %arg7[%c0_27, %c0_28] : memref<8x1xf32, #tpu.memory_space<vmem>>, vector<8x1xf32>
      tpu.vector_store %arg7[%c0_27, %c0_28], %46 {strides = array<i32>} : memref<8x1xf32, #tpu.memory_space<vmem>>, vector<8x1xf32>,
      %cst_29 = arith.constant 0.000000e+00 : f32
      %48 = vector.broadcast %cst_29 : f32 to vector<8x1xf32>
      %c0_30 = arith.constant 0 : index
      %c0_31 = arith.constant 0 : index
      %49 = vector.load %arg8[%c0_30, %c0_31] : memref<8x1xf32, #tpu.memory_space<vmem>>, vector<8x1xf32>
      tpu.vector_store %arg8[%c0_30, %c0_31], %48 {strides = array<i32>} : memref<8x1xf32, #tpu.memory_space<vmem>>, vector<8x1xf32>,
      %cst_32 = arith.constant 0.000000e+00 : f32
      %50 = vector.broadcast %cst_32 : f32 to vector<8x1xf32>
      %c0_33 = arith.constant 0 : index
      %c0_34 = arith.constant 0 : index
      %51 = vector.load %arg9[%c0_33, %c0_34] : memref<8x1xf32, #tpu.memory_space<vmem>>, vector<8x1xf32>
      tpu.vector_store %arg9[%c0_33, %c0_34], %50 {strides = array<i32>} : memref<8x1xf32, #tpu.memory_space<vmem>>, vector<8x1xf32>,
    } else {
    }
    %c0 = arith.constant 0 : index
    %c0_1 = arith.constant 0 : index
    %3 = vector.load %arg2[%c0, %c0_1] : memref<8x32xbf16, #tpu.memory_space<vmem>>, vector<8x32xbf16>
    %c0_2 = arith.constant 0 : index
    %c0_3 = arith.constant 0 : index
    %4 = vector.load %arg3[%c0_2, %c0_3] : memref<512x32xbf16, #tpu.memory_space<vmem>>, vector<512x32xbf16>
    %cst = arith.constant dense<0.000000e+00> : vector<8x512xf32>
    %5 = tpu.matmul %3, %4, %cst {dimension_numbers = #tpu.dot_dimension_numbers<[1], [1], [0], [0], [0, 0, 1, 0], [], []>} : vector<8x32xbf16>, vector<512x32xbf16>, vector<8x512xf32> -> vector<8x512xf32>
    %c0_4 = arith.constant 0 : index
    %c0_5 = arith.constant 0 : index
    %6 = vector.load %arg4[%c0_4, %c0_5] : memref<1x512xf32, #tpu.memory_space<vmem>>, vector<1x512xf32>
    %7 = vector.broadcast %6 : vector<1x512xf32> to vector<8x512xf32>
    %8 = arith.addf %5, %7 : vector<8x512xf32>
    %c512_i32 = arith.constant 512 : i32
    %9 = arith.muli %arg1, %c512_i32 : i32
    %10 = tpu.iota {dimensions = array<i32: 1>} : vector<8x512xi32>
    %11 = vector.broadcast %9 : i32 to vector<8x512xi32>
    %12 = arith.addi %11, %10 : vector<8x512xi32>
    %c1000_i32 = arith.constant 1000 : i32
    %13 = vector.broadcast %c1000_i32 : i32 to vector<8x512xi32>
    %14 = arith.cmpi slt, %12, %13 : vector<8x512xi32>
    %cst_6 = arith.constant 0xFF800000 : f32
    %15 = vector.broadcast %cst_6 : f32 to vector<8x512xf32>
    %16 = arith.select %14, %8, %15 : vector<8x512xi1>, vector<8x512xf32>
    %c0_7 = arith.constant 0 : index
    %c0_8 = arith.constant 0 : index
    %17 = vector.load %arg7[%c0_7, %c0_8] : memref<8x1xf32, #tpu.memory_space<vmem>>, vector<8x1xf32>
    %cst_9 = arith.constant dense<0xFF800000> : vector<8xf32>
    %18 = vector.multi_reduction <maximumf>, %16, %cst_9 [1] : vector<8x512xf32> to vector<8xf32>
    %19 = vector.shape_cast %18 : vector<8xf32> to vector<8x1xf32>
    %20 = arith.maximumf %17, %19 : vector<8x1xf32>
    %c0_10 = arith.constant 0 : index
    %c0_11 = arith.constant 0 : index
    %21 = vector.load %arg8[%c0_10, %c0_11] : memref<8x1xf32, #tpu.memory_space<vmem>>, vector<8x1xf32>
    %22 = arith.subf %17, %20 : vector<8x1xf32>
    %23 = math.exp %22 : vector<8x1xf32>
    %24 = arith.mulf %21, %23 : vector<8x1xf32>
    %25 = vector.broadcast %20 : vector<8x1xf32> to vector<8x512xf32>
    %26 = arith.subf %16, %25 : vector<8x512xf32>
    %27 = math.exp %26 : vector<8x512xf32>
    %cst_12 = arith.constant dense<0.000000e+00> : vector<8xf32>
    %28 = vector.multi_reduction <add>, %27, %cst_12 [1] : vector<8x512xf32> to vector<8xf32>
    %29 = vector.shape_cast %28 : vector<8xf32> to vector<8x1xf32>
    %30 = arith.addf %24, %29 : vector<8x1xf32>
    %c0_13 = arith.constant 0 : index
    %c0_14 = arith.constant 0 : index
    %31 = vector.load %arg8[%c0_13, %c0_14] : memref<8x1xf32, #tpu.memory_space<vmem>>, vector<8x1xf32>
    tpu.vector_store %arg8[%c0_13, %c0_14], %30 {strides = array<i32>} : memref<8x1xf32, #tpu.memory_space<vmem>>, vector<8x1xf32>,
    %c0_15 = arith.constant 0 : index
    %c0_16 = arith.constant 0 : index
    %32 = vector.load %arg7[%c0_15, %c0_16] : memref<8x1xf32, #tpu.memory_space<vmem>>, vector<8x1xf32>
    tpu.vector_store %arg7[%c0_15, %c0_16], %20 {strides = array<i32>} : memref<8x1xf32, #tpu.memory_space<vmem>>, vector<8x1xf32>,
    %c0_17 = arith.constant 0 : index
    %c0_18 = arith.constant 0 : index
    %33 = vector.load %arg5[%c0_17, %c0_18] : memref<8x1xi32, #tpu.memory_space<vmem>>, vector<8x1xi32>
    %34 = vector.broadcast %33 : vector<8x1xi32> to vector<8x512xi32>
    %35 = arith.cmpi eq, %12, %34 : vector<8x512xi32>
    %c0_19 = arith.constant 0 : index
    %c0_20 = arith.constant 0 : index
    %36 = vector.load %arg9[%c0_19, %c0_20] : memref<8x1xf32, #tpu.memory_space<vmem>>, vector<8x1xf32>
    %cst_21 = arith.constant 0.000000e+00 : f32
    %37 = vector.broadcast %cst_21 : f32 to vector<8x512xf32>
    %38 = arith.select %35, %16, %37 : vector<8x512xi1>, vector<8x512xf32>
    %cst_22 = arith.constant dense<0.000000e+00> : vector<8xf32>
    %39 = vector.multi_reduction <add>, %38, %cst_22 [1] : vector<8x512xf32> to vector<8xf32>
    %40 = vector.shape_cast %39 : vector<8xf32> to vector<8x1xf32>
    %41 = arith.addf %36, %40 : vector<8x1xf32>
    %c0_23 = arith.constant 0 : index
    %c0_24 = arith.constant 0 : index
    %42 = vector.load %arg9[%c0_23, %c0_24] : memref<8x1xf32, #tpu.memory_space<vmem>>, vector<8x1xf32>
    tpu.vector_store %arg9[%c0_23, %c0_24], %41 {strides = array<i32>} : memref<8x1xf32, #tpu.memory_space<vmem>>, vector<8x1xf32>,
    %c1_i32 = arith.constant 1 : i32
    %43 = arith.cmpi eq, %arg1, %c1_i32 : i32
    %44 = arith.extui %43 : i1 to i32
    %c0_i32_25 = arith.constant 0 : i32
    %45 = arith.cmpi ne, %44, %c0_i32_25 : i32
    scf.if %45 {
      %c0_26 = arith.constant 0 : index
      %c0_27 = arith.constant 0 : index
      %46 = vector.load %arg7[%c0_26, %c0_27] : memref<8x1xf32, #tpu.memory_space<vmem>>, vector<8x1xf32>
      %c0_28 = arith.constant 0 : index
      %c0_29 = arith.constant 0 : index
      %47 = vector.load %arg8[%c0_28, %c0_29] : memref<8x1xf32, #tpu.memory_space<vmem>>, vector<8x1xf32>
      %48 = math.log %47 : vector<8x1xf32>
      %49 = arith.addf %46, %48 : vector<8x1xf32>
      %c0_30 = arith.constant 0 : index
      %c0_31 = arith.constant 0 : index
      %50 = vector.load %arg9[%c0_30, %c0_31] : memref<8x1xf32, #tpu.memory_space<vmem>>, vector<8x1xf32>
      %51 = arith.subf %49, %50 : vector<8x1xf32>
      %c-100_i32 = arith.constant -100 : i32
      %52 = vector.broadcast %c-100_i32 : i32 to vector<8x1xi32>
      %53 = arith.cmpi eq, %33, %52 : vector<8x1xi32>
      %cst_32 = arith.constant 0.000000e+00 : f32
      %54 = vector.broadcast %cst_32 : f32 to vector<8x1xf32>
      %55 = arith.select %53, %54, %51 : vector<8x1xi1>, vector<8x1xf32>
      %c0_33 = arith.constant 0 : index
      %c0_34 = arith.constant 0 : index
      %56 = vector.load %arg6[%c0_33, %c0_34] : memref<8x1xf32, #tpu.memory_space<vmem>>, vector<8x1xf32>
      tpu.vector_store %arg6[%c0_33, %c0_34], %55 {strides = array<i32>} : memref<8x1xf32, #tpu.memory_space<vmem>>, vector<8x1xf32>,
    } else {
    }
    return
  }
  func.func @transform_0(%arg0: i32, %arg1: i32) -> (i32, i32) {
    %c0_i32 = arith.constant 0 : i32
    %c0_i32_0 = arith.constant 0 : i32
    return %arg0, %c0_i32 : i32, i32
  }
  func.func @transform_1(%arg0: i32, %arg1: i32) -> (i32, i32) {
    %c0_i32 = arith.constant 0 : i32
    %c0_i32_0 = arith.constant 0 : i32
    return %arg1, %c0_i32 : i32, i32
  }
  func.func @transform_2(%arg0: i32, %arg1: i32) -> (i32, i32) {
    %c0_i32 = arith.constant 0 : i32
    %c0_i32_0 = arith.constant 0 : i32
    return %c0_i32, %arg1 : i32, i32
  }
  func.func @transform_3(%arg0: i32, %arg1: i32) -> (i32, i32) {
    %c0_i32 = arith.constant 0 : i32
    %c0_i32_0 = arith.constant 0 : i32
    return %arg0, %c0_i32 : i32, i32
  }
  func.func @transform_4(%arg0: i32, %arg1: i32) -> (i32, i32) {
    %c0_i32 = arith.constant 0 : i32
    %c0_i32_0 = arith.constant 0 : i32
    return %arg0, %c0_i32 : i32, i32
  }
}

</mosaic_0001>

<llo_original>
// kernel: tpu_custom_call.1
$region0: #{tpu_custom_call.1}
  #allocation0 [shape = 'u32[]', space=smem, size = 0x4, offset = 0x4, fixed_abs, tag = 'smem constant byte address 0x4 - core index']
  #allocation1 [shape = 'u32[144,128]{1,0:T(1,128)}', space=vmem, size = 0x12000, scoped, tag = 'internal scratch']
  #allocation2 [shape = 'f32[8,1]{1,0:T(8,128)}', space=vmem, size = 0x1000, scoped, tag = 'scratch operand']
  #allocation3 [shape = 'f32[8,1]{1,0:T(8,128)}', space=vmem, size = 0x1000, scoped, tag = 'scratch operand']
  #allocation4 [shape = 'f32[8,1]{1,0:T(8,128)}', space=vmem, size = 0x1000, scoped, tag = 'scratch operand']
  %s0 = inlined_call_operand.vmem [shape: bf16[16,32], index: 0, kind: input, shape index: {}]
  %s1 = inlined_call_operand.vmem [shape: bf16[1000,32], index: 1, kind: input, shape index: {}]
  %s2 = inlined_call_operand.vmem [shape: f32[1,1000], index: 2, kind: input, shape index: {}]
  %s3 = inlined_call_operand.vmem [shape: s32[16,1], index: 3, kind: input, shape index: {}]
  %s4 = inlined_call_operand.vmem [shape: f32[16,1], index: 4, kind: output, shape index: {}]
  %s5 = sld [smem:[#allocation0]]
  $region57: #{tpu_custom_call.1} parent=0
    _
  %s7 = ssub.s32 1, %s5
  %s8 = scalar_select 0, %s7, %s5
  loop: start=0, step=1, limit=6
  $region2: #{tpu_custom_call.1} parent=0 // loop_pre_header
    _
  $region3: #{tpu_custom_call.1} parent=0 // loop_header
    %s10 = sphi 0, %s14
    %p11 = scmp.ge.s32.totalorder %s10, 6
    %s17 = sphi 0, %s29
    %s18 = sphi 0, %s25
    %s19 = sphi 0, %s17
    %s20 = sphi 0, %s18
    %s21 = sphi 0, %s19
    %s22 = sphi 0, %s20
    %s32 = sphi 0, %s34
    %s35 = sphi 0, %s32
    %s36 = sphi 0, %s35
    %s52 = sphi 0, %s36
    %s58 = sphi 0, %s60
    %s61 = sphi 0, %s58
    %s62 = sphi 0, %s61
    %s78 = sphi 0, %s62
    %s84 = sphi 0, %s86
    %s87 = sphi 0, %s84
    %s88 = sphi 0, %s87
    %s104 = sphi 0, %s88
    %s110 = sphi 0, %s112
    %s113 = sphi 0, %s110
    %s114 = sphi 0, %s113
    %s130 = sphi 0, %s114
    %s136 = sphi 0, %s138
    %s139 = sphi 0, %s136
    %s140 = sphi 0, %s139
    %s156 = sphi 0, %s140
  $region4: #{tpu_custom_call.1} parent=0 // loop_header_branch
    %13 = sbr.rel (%p11) target = $region8
  $region5: #{tpu_custom_call.1} parent=0 // loop_body
    %s15 = ssub.s32 %s10, 1
    %s16 = ssub.s32 %s10, 2
    %s23 = sadd.s32 1, %s18
    %p24 = scmp.ge.s32.totalorder %s23, 2
    %s25 = scalar_select %p24, 0, %s23
    %s26 = sadd.s32 1, %s17
    %s27 = scalar_select %p24, %s26, %s17
    %p28 = scmp.ge.s32.totalorder %s27, 2
    %s29 = scalar_select %p28, 0, %s27
    %s30 = ssub.s32 %s17, %s29
    %p31 = scmp.eq.s32.totalorder %s30, 0
    %s33 = sadd.s32 %s32, 1
    %s34 = scalar_select %p31, %s32, %s33
    %p37 = pneg %p31
    %p38 = scmp.eq.s32.totalorder %s10, 3
    %p39 = por %p37, %p38
    %p40 = scmp.ne.s32.totalorder %s32, %s35
    %p41 = scmp.eq.s32.totalorder %s10, 0
    %p42 = por %p40, %p41
    %p43 = scmp.ne.s32.totalorder %s32, %s35
    %p44 = scmp.eq.s32.totalorder %s15, 3
    %p45 = por %p43, %p44
    %p46 = scmp.ne.s32.totalorder %s35, %s36
    %p47 = scmp.eq.s32.totalorder %s15, 0
    %p48 = por %p46, %p47
    %p49 = scmp.ne.s32.totalorder %s35, %s36
    %p50 = scmp.eq.s32.totalorder %s16, 3
    %p51 = por %p49, %p50
    %p53 = scmp.ne.s32.totalorder %s36, %s52
    %p54 = scmp.eq.s32.totalorder %s16, 0
    %p55 = por %p53, %p54
    %s56 = ssub.s32 %s18, %s25
    %p57 = scmp.eq.s32.totalorder %s56, 0
    %s59 = sadd.s32 %s58, 1
    %s60 = scalar_select %p57, %s58, %s59
    %p63 = pneg %p57
    %p64 = scmp.eq.s32.totalorder %s10, 3
    %p65 = por %p63, %p64
    %p66 = scmp.ne.s32.totalorder %s58, %s61
    %p67 = scmp.eq.s32.totalorder %s10, 0
    %p68 = por %p66, %p67
    %p69 = scmp.ne.s32.totalorder %s58, %s61
    %p70 = scmp.eq.s32.totalorder %s15, 3
    %p71 = por %p69, %p70
    %p72 = scmp.ne.s32.totalorder %s61, %s62
    %p73 = scmp.eq.s32.totalorder %s15, 0
    %p74 = por %p72, %p73
    %p75 = scmp.ne.s32.totalorder %s61, %s62
    %p76 = scmp.eq.s32.totalorder %s16, 3
    %p77 = por %p75, %p76
    %p79 = scmp.ne.s32.totalorder %s62, %s78
    %p80 = scmp.eq.s32.totalorder %s16, 0
    %p81 = por %p79, %p80
    %s82 = ssub.s32 %s18, %s25
    %p83 = scmp.eq.s32.totalorder %s82, 0
    %s85 = sadd.s32 %s84, 1
    %s86 = scalar_select %p83, %s84, %s85
    %p89 = pneg %p83
    %p90 = scmp.eq.s32.totalorder %s10, 3
    %p91 = por %p89, %p90
    %p92 = scmp.ne.s32.totalorder %s84, %s87
    %p93 = scmp.eq.s32.totalorder %s10, 0
    %p94 = por %p92, %p93
    %p95 = scmp.ne.s32.totalorder %s84, %s87
    %p96 = scmp.eq.s32.totalorder %s15, 3
    %p97 = por %p95, %p96
    %p98 = scmp.ne.s32.totalorder %s87, %s88
    %p99 = scmp.eq.s32.totalorder %s15, 0
    %p100 = por %p98, %p99
    %p101 = scmp.ne.s32.totalorder %s87, %s88
    %p102 = scmp.eq.s32.totalorder %s16, 3
    %p103 = por %p101, %p102
    %p105 = scmp.ne.s32.totalorder %s88, %s104
    %p106 = scmp.eq.s32.totalorder %s16, 0
    %p107 = por %p105, %p106
    %s108 = ssub.s32 %s17, %s29
    %p109 = scmp.eq.s32.totalorder %s108, 0
    %s111 = sadd.s32 %s110, 1
    %s112 = scalar_select %p109, %s110, %s111
    %p115 = pneg %p109
    %p116 = scmp.eq.s32.totalorder %s10, 3
    %p117 = por %p115, %p116
    %p118 = scmp.ne.s32.totalorder %s110, %s113
    %p119 = scmp.eq.s32.totalorder %s10, 0
    %p120 = por %p118, %p119
    %p121 = scmp.ne.s32.totalorder %s110, %s113
    %p122 = scmp.eq.s32.totalorder %s15, 3
    %p123 = por %p121, %p122
    %p124 = scmp.ne.s32.totalorder %s113, %s114
    %p125 = scmp.eq.s32.totalorder %s15, 0
    %p126 = por %p124, %p125
    %p127 = scmp.ne.s32.totalorder %s113, %s114
    %p128 = scmp.eq.s32.totalorder %s16, 3
    %p129 = por %p127, %p128
    %p131 = scmp.ne.s32.totalorder %s114, %s130
    %p132 = scmp.eq.s32.totalorder %s16, 0
    %p133 = por %p131, %p132
    %s134 = ssub.s32 %s17, %s29
    %p135 = scmp.eq.s32.totalorder %s134, 0
    %s137 = sadd.s32 %s136, 1
    %s138 = scalar_select %p135, %s136, %s137
    %p141 = pneg %p135
    %p142 = scmp.eq.s32.totalorder %s10, 3
    %p143 = por %p141, %p142
    %p144 = scmp.ne.s32.totalorder %s136, %s139
    %p145 = scmp.eq.s32.totalorder %s10, 0
    %p146 = por %p144, %p145
    %p147 = scmp.ne.s32.totalorder %s136, %s139
    %p148 = scmp.eq.s32.totalorder %s15, 3
    %p149 = por %p147, %p148
    %p150 = scmp.ne.s32.totalorder %s139, %s140
    %p151 = scmp.eq.s32.totalorder %s15, 0
    %p152 = por %p150, %p151
    %p153 = scmp.ne.s32.totalorder %s139, %s140
    %p154 = scmp.eq.s32.totalorder %s16, 3
    %p155 = por %p153, %p154
    %p157 = scmp.ne.s32.totalorder %s140, %s156
    %p158 = scmp.eq.s32.totalorder %s16, 0
    %p159 = por %p157, %p158
    %p160 = scmp.le.s32.totalorder 1, %s10
    %p161 = scmp.lt.s32.totalorder %s10, 5
    %p162 = pnand %p160, %p161
    %p163 = pneg %p162
    // Predicated region
    $region9: #{tpu_custom_call.1} parent=5 // pred_check
      _
    $region10: #{tpu_custom_call.1} parent=5 // pred_check_branch
      %165 = sbr.rel (%p162) target = $region12
    $region11: #{tpu_custom_call.1} parent=5 // pred_region
      %s166 = ssub.s32 %s10, 1
    $region12: #{tpu_custom_call.1} parent=5 // pred_fallthru
      _
    %p167 = scmp.lt.s32.totalorder %s10, 4
    // Predicated region
    $region13: #{tpu_custom_call.1} parent=5 // pred_check
      %p168 = pneg %p167
    $region14: #{tpu_custom_call.1} parent=5 // pred_check_branch
      %170 = sbr.rel (%p168) target = $region16
    $region15: #{tpu_custom_call.1} parent=5 // pred_region
      // Predicated region
      $region17: #{tpu_custom_call.1} parent=15 // pred_check
        %p171 = pneg %p42
      $region18: #{tpu_custom_call.1} parent=15 // pred_check_branch
        %173 = sbr.rel (%p171) target = $region20
      $region19: #{tpu_custom_call.1} parent=15 // pred_region
        %p174 = scmp.lt.s32.totalorder %s17, 1
        %s175 = scalar_select %p174, %s17, 1
        %s176 = smul.addr %s175, 4
        %s177 = scalar_lea.vmem %s0, %s176
      $region20: #{tpu_custom_call.1} parent=15 // pred_fallthru
        _
      // Predicated region
      $region21: #{tpu_custom_call.1} parent=15 // pred_check
        %p178 = pneg %p68
      $region22: #{tpu_custom_call.1} parent=15 // pred_check_branch
        %180 = sbr.rel (%p178) target = $region24
      $region23: #{tpu_custom_call.1} parent=15 // pred_region
        %s181 = smul.u32 64, %s18
        %s182 = ssub.s32 125, %s181
        %p183 = scmp.lt.s32.totalorder %s182, 64
        %s184 = scalar_select %p183, %s182, 64
        %s185 = smul.u32 64, %s184
        %p186 = scmp.lt.s32.totalorder %s181, 124
        %s187 = scalar_select %p186, %s181, 124
        %s188 = smul.addr %s187, 4
        %s189 = scalar_lea.vmem %s1, %s188
        %s190 = smul.u32 64, %s18
        %s191 = ssub.s32 125, %s190
        %p192 = scmp.lt.s32.totalorder %s191, 64
        %s193 = scalar_select %p192, %s191, 64
        %s194 = smul.u32 64, %s193
      $region24: #{tpu_custom_call.1} parent=15 // pred_fallthru
        _
      // Predicated region
      $region25: #{tpu_custom_call.1} parent=15 // pred_check
        %p195 = pneg %p94
      $region26: #{tpu_custom_call.1} parent=15 // pred_check_branch
        %197 = sbr.rel (%p195) target = $region28
      $region27: #{tpu_custom_call.1} parent=15 // pred_region
        %s198 = smul.u32 4, %s18
        %p199 = scmp.lt.s32.totalorder %s198, 7
        %s200 = scalar_select %p199, %s198, 7
        %s201 = scalar_lea.vmem %s2, %s200
        %s202 = smul.u32 4, %s18
      $region28: #{tpu_custom_call.1} parent=15 // pred_fallthru
        _
      // Predicated region
      $region29: #{tpu_custom_call.1} parent=15 // pred_check
        %p203 = pneg %p120
      $region30: #{tpu_custom_call.1} parent=15 // pred_check_branch
        %205 = sbr.rel (%p203) target = $region32
      $region31: #{tpu_custom_call.1} parent=15 // pred_region
        %p206 = scmp.lt.s32.totalorder %s17, 1
        %s207 = scalar_select %p206, %s17, 1
        %s208 = smul.addr %s207, 8
        %s209 = scalar_lea.vmem %s3, %s208
      $region32: #{tpu_custom_call.1} parent=15 // pred_fallthru
        _
    $region16: #{tpu_custom_call.1} parent=5 // pred_fallthru
      _
    %p210 = scmp.le.s32.totalorder 1, %s10
    %p211 = scmp.lt.s32.totalorder %s10, 5
    %p212 = pnand %p210, %p211
    %p213 = pneg %p212
    // Predicated region
    $region33: #{tpu_custom_call.1} parent=5 // pred_check
      _
    $region34: #{tpu_custom_call.1} parent=5 // pred_check_branch
      %215 = sbr.rel (%p212) target = $region36
    $region35: #{tpu_custom_call.1} parent=5 // pred_region
      %s216 = ssub.s32 %s10, 1
      %p217 = scmp.lt.s32.totalorder %s19, 1
      %s218 = scalar_select %p217, %s19, 1
      %s219 = smul.addr %s218, 4
      %s220 = scalar_lea.vmem %s0, %s219
      %p221 = pneg %p48
      %p222 = pneg %p45
      %s223 = smul.u32 64, %s20
      %s224 = ssub.s32 125, %s223
      %p225 = scmp.lt.s32.totalorder %s224, 64
      %s226 = scalar_select %p225, %s224, 64
      %s227 = smul.u32 64, %s226
      %p228 = scmp.lt.s32.totalorder %s223, 124
      %s229 = scalar_select %p228, %s223, 124
      %s230 = smul.addr %s229, 4
      %s231 = scalar_lea.vmem %s1, %s230
      %p232 = pneg %p74
      %p233 = pneg %p71
      %s234 = smul.u32 4, %s20
      %p235 = scmp.lt.s32.totalorder %s234, 7
      %s236 = scalar_select %p235, %s234, 7
      %s237 = scalar_lea.vmem %s2, %s236
      %p238 = pneg %p100
      %p239 = pneg %p97
      %p240 = scmp.lt.s32.totalorder %s19, 1
      %s241 = scalar_select %p240, %s19, 1
      %s242 = smul.addr %s241, 8
      %s243 = scalar_lea.vmem %s3, %s242
      %p244 = pneg %p126
      %p245 = pneg %p123
      %p246 = pneg %p152
      %p247 = pneg %p149
      %p248 = scmp.lt.s32.totalorder %s19, 1
      %s249 = scalar_select %p248, %s19, 1
      %s250 = smul.addr %s249, 8
      %s251 = scalar_lea.vmem %s4, %s250
      %p252 = scmp.lt.s32.totalorder %s19, 1
      %s253 = scalar_select %p252, %s19, 1
      %s254 = smul.addr %s253, 4
      %s255 = scalar_lea.vmem %s0, %s254
      %s256 = smul.u32 64, %s20
      %s257 = ssub.s32 125, %s256
      %p258 = scmp.lt.s32.totalorder %s257, 64
      %s259 = scalar_select %p258, %s257, 64
      %s260 = smul.u32 64, %s259
      %p261 = scmp.lt.s32.totalorder %s256, 124
      %s262 = scalar_select %p261, %s256, 124
      %s263 = smul.addr %s262, 4
      %s264 = scalar_lea.vmem %s1, %s263
      %s265 = smul.u32 64, %s20
      %s266 = ssub.s32 125, %s265
      %p267 = scmp.lt.s32.totalorder %s266, 64
      %s268 = scalar_select %p267, %s266, 64
      %s269 = smul.u32 64, %s268
      %s270 = smul.u32 4, %s20
      %p271 = scmp.lt.s32.totalorder %s270, 7
      %s272 = scalar_select %p271, %s270, 7
      %s273 = scalar_lea.vmem %s2, %s272
      %s274 = smul.u32 4, %s20
      %p275 = scmp.lt.s32.totalorder %s19, 1
      %s276 = scalar_select %p275, %s19, 1
      %s277 = smul.addr %s276, 8
      %s278 = scalar_lea.vmem %s3, %s277
      %p279 = scmp.lt.s32.totalorder %s19, 1
      %s280 = scalar_select %p279, %s19, 1
      %s281 = smul.addr %s280, 8
      %s282 = scalar_lea.vmem %s4, %s281
      %p284 = scmp.eq.s32.totalorder %s20, 0
      // Predicated region
      $region37: #{tpu_custom_call.1} parent=35 // pred_check
        %p285 = pneg %p284
      $region38: #{tpu_custom_call.1} parent=35 // pred_check_branch
        %287 = sbr.rel (%p285) target = $region40
      $region39: #{tpu_custom_call.1} parent=35 // pred_region
        %vm288 = vcmask 7168
        %289 = vst.msk [vmem:[#allocation2] sm:$0xff] %vm288, -inf
        %290 = vst.msk [vmem:[#allocation3] sm:$0xff] %vm288, 0.0
        %291 = vst.msk [vmem:[#allocation4] sm:$0xff] %vm288, 0.0
      $region40: #{tpu_custom_call.1} parent=35 // pred_fallthru
        _
      %v292 = vld [vmem:[%s255] sm:$0xf]
      %v293 = vld [vmem:[%s264] sm:$0xf]
      %v294 = vld [vmem:[%s264 + $0x4] sm:$0xf]
      %v295 = vld [vmem:[%s264 + $0x8] sm:$0xf]
      %v296 = vld [vmem:[%s264 + $0xc] sm:$0xf]
      %v297 = vld [vmem:[%s264 + $0x10] sm:$0xf]
      %v298 = vld [vmem:[%s264 + $0x14] sm:$0xf]
      %v299 = vld [vmem:[%s264 + $0x18] sm:$0xf]
      %v300 = vld [vmem:[%s264 + $0x1c] sm:$0xf]
      %v301 = vld [vmem:[%s264 + $0x20] sm:$0xf]
      %v302 = vld [vmem:[%s264 + $0x24] sm:$0xf]
      %v303 = vld [vmem:[%s264 + $0x28] sm:$0xf]
      %v304 = vld [vmem:[%s264 + $0x2c] sm:$0xf]
      %v305 = vld [vmem:[%s264 + $0x30] sm:$0xf]
      %v306 = vld [vmem:[%s264 + $0x34] sm:$0xf]
      %v307 = vld [vmem:[%s264 + $0x38] sm:$0xf]
      %v308 = vld [vmem:[%s264 + $0x3c] sm:$0xf]
      %v309 = vld [vmem:[%s264 + $0x40] sm:$0xf]
      %v310 = vld [vmem:[%s264 + $0x44] sm:$0xf]
      %v311 = vld [vmem:[%s264 + $0x48] sm:$0xf]
      %v312 = vld [vmem:[%s264 + $0x4c] sm:$0xf]
      %v313 = vld [vmem:[%s264 + $0x50] sm:$0xf]
      %v314 = vld [vmem:[%s264 + $0x54] sm:$0xf]
      %v315 = vld [vmem:[%s264 + $0x58] sm:$0xf]
      %v316 = vld [vmem:[%s264 + $0x5c] sm:$0xf]
      %v317 = vld [vmem:[%s264 + $0x60] sm:$0xf]
      %v318 = vld [vmem:[%s264 + $0x64] sm:$0xf]
      %v319 = vld [vmem:[%s264 + $0x68] sm:$0xf]
      %v320 = vld [vmem:[%s264 + $0x6c] sm:$0xf]
      %v321 = vld [vmem:[%s264 + $0x70] sm:$0xf]
      %v322 = vld [vmem:[%s264 + $0x74] sm:$0xf]
      %v323 = vld [vmem:[%s264 + $0x78] sm:$0xf]
      %v324 = vld [vmem:[%s264 + $0x7c] sm:$0xf]
      %v325 = vld [vmem:[%s264 + $0x80] sm:$0xf]
      %v326 = vld [vmem:[%s264 + $0x84] sm:$0xf]
      %v327 = vld [vmem:[%s264 + $0x88] sm:$0xf]
      %v328 = vld [vmem:[%s264 + $0x8c] sm:$0xf]
      %v329 = vld [vmem:[%s264 + $0x90] sm:$0xf]
      %v330 = vld [vmem:[%s264 + $0x94] sm:$0xf]
      %v331 = vld [vmem:[%s264 + $0x98] sm:$0xf]
      %v332 = vld [vmem:[%s264 + $0x9c] sm:$0xf]
      %v333 = vld [vmem:[%s264 + $0xa0] sm:$0xf]
      %v334 = vld [vmem:[%s264 + $0xa4] sm:$0xf]
      %v335 = vld [vmem:[%s264 + $0xa8] sm:$0xf]
      %v336 = vld [vmem:[%s264 + $0xac] sm:$0xf]
      %v337 = vld [vmem:[%s264 + $0xb0] sm:$0xf]
      %v338 = vld [vmem:[%s264 + $0xb4] sm:$0xf]
      %v339 = vld [vmem:[%s264 + $0xb8] sm:$0xf]
      %v340 = vld [vmem:[%s264 + $0xbc] sm:$0xf]
      %v341 = vld [vmem:[%s264 + $0xc0] sm:$0xf]
      %v342 = vld [vmem:[%s264 + $0xc4] sm:$0xf]
      %v343 = vld [vmem:[%s264 + $0xc8] sm:$0xf]
      %v344 = vld [vmem:[%s264 + $0xcc] sm:$0xf]
      %v345 = vld [vmem:[%s264 + $0xd0] sm:$0xf]
      %v346 = vld [vmem:[%s264 + $0xd4] sm:$0xf]
      %v347 = vld [vmem:[%s264 + $0xd8] sm:$0xf]
      %v348 = vld [vmem:[%s264 + $0xdc] sm:$0xf]
      %v349 = vld [vmem:[%s264 + $0xe0] sm:$0xf]
      %v350 = vld [vmem:[%s264 + $0xe4] sm:$0xf]
      %v351 = vld [vmem:[%s264 + $0xe8] sm:$0xf]
      %v352 = vld [vmem:[%s264 + $0xec] sm:$0xf]
      %v353 = vld [vmem:[%s264 + $0xf0] sm:$0xf]
      %v354 = vld [vmem:[%s264 + $0xf4] sm:$0xf]
      %v355 = vld [vmem:[%s264 + $0xf8] sm:$0xf]
      %v356 = vld [vmem:[%s264 + $0xfc] sm:$0xf]
      %v357 = vld [vmem:[%s273] sm:$0xf]
      %v359 = vlaneseq
      %v360 = vshrl.u32 %v359, 7
      %v361 = vsub.s32 0, %v360
      %v362 = vrot.slane %v357, %v361
      %v363 = vlaneseq
      %v364 = vshrl.u32 %v363, 7
      %v365 = vsub.s32 1, %v364
      %v366 = vrot.slane %v357, %v365
      %v367 = vlaneseq
      %v368 = vshrl.u32 %v367, 7
      %v369 = vsub.s32 2, %v368
      %v370 = vrot.slane %v357, %v369
      %v371 = vlaneseq
      %v372 = vshrl.u32 %v371, 7
      %v373 = vsub.s32 3, %v372
      %v374 = vrot.slane %v357, %v373
      %v443 = vunpack.c.l.b16 %v293
      %v444 = vunpack.c.l.b16 %v294
      %v445 = vunpack.c.l.b16 %v295
      %v446 = vunpack.c.l.b16 %v296
      %v447 = vunpack.c.l.b16 %v297
      %v448 = vunpack.c.l.b16 %v298
      %v449 = vunpack.c.l.b16 %v299
      %v450 = vunpack.c.l.b16 %v300
      %v451 = vunpack.c.l.b16 %v301
      %v452 = vunpack.c.l.b16 %v302
      %v453 = vunpack.c.l.b16 %v303
      %v454 = vunpack.c.l.b16 %v304
      %v455 = vunpack.c.l.b16 %v305
      %v456 = vunpack.c.l.b16 %v306
      %v457 = vunpack.c.l.b16 %v307
      %v458 = vunpack.c.l.b16 %v308
      %v459 = vunpack.c.l.b16 %v309
      %v460 = vunpack.c.l.b16 %v310
      %v461 = vunpack.c.l.b16 %v311
      %v462 = vunpack.c.l.b16 %v312
      %v463 = vunpack.c.l.b16 %v313
      %v464 = vunpack.c.l.b16 %v314
      %v465 = vunpack.c.l.b16 %v315
      %v466 = vunpack.c.l.b16 %v316
      %v467 = vunpack.c.l.b16 %v317
      %v468 = vunpack.c.l.b16 %v318
      %v469 = vunpack.c.l.b16 %v319
      %v470 = vunpack.c.l.b16 %v320
      %v471 = vunpack.c.l.b16 %v321
      %v472 = vunpack.c.l.b16 %v322
      %v473 = vunpack.c.l.b16 %v323
      %v474 = vunpack.c.l.b16 %v324
      %v475 = vunpack.c.l.b16 %v325
      %v476 = vunpack.c.l.b16 %v326
      %v477 = vunpack.c.l.b16 %v327
      %v478 = vunpack.c.l.b16 %v328
      %v479 = vunpack.c.l.b16 %v329
      %v480 = vunpack.c.l.b16 %v330
      %v481 = vunpack.c.l.b16 %v331
      %v482 = vunpack.c.l.b16 %v332
      %v483 = vunpack.c.l.b16 %v333
      %v484 = vunpack.c.l.b16 %v334
      %v485 = vunpack.c.l.b16 %v335
      %v486 = vunpack.c.l.b16 %v336
      %v487 = vunpack.c.l.b16 %v337
      %v488 = vunpack.c.l.b16 %v338
      %v489 = vunpack.c.l.b16 %v339
      %v490 = vunpack.c.l.b16 %v340
      %v491 = vunpack.c.l.b16 %v341
      %v492 = vunpack.c.l.b16 %v342
      %v493 = vunpack.c.l.b16 %v343
      %v494 = vunpack.c.l.b16 %v344
      %v495 = vunpack.c.l.b16 %v345
      %v496 = vunpack.c.l.b16 %v346
      %v497 = vunpack.c.l.b16 %v347
      %v498 = vunpack.c.l.b16 %v348
      %v499 = vunpack.c.l.b16 %v349
      %v500 = vunpack.c.l.b16 %v350
      %v501 = vunpack.c.l.b16 %v351
      %v502 = vunpack.c.l.b16 %v352
      %v503 = vunpack.c.l.b16 %v353
      %v504 = vunpack.c.l.b16 %v354
      %v505 = vunpack.c.l.b16 %v355
      %v506 = vunpack.c.l.b16 %v356
      %v507 = vpack.c.b16 %v444, %v443
      %v508 = vpack.c.b16 %v446, %v445
      %v509 = vpack.c.b16 %v448, %v447
      %v510 = vpack.c.b16 %v450, %v449
      %v511 = vpack.c.b16 %v452, %v451
      %v512 = vpack.c.b16 %v454, %v453
      %v513 = vpack.c.b16 %v456, %v455
      %v514 = vpack.c.b16 %v458, %v457
      %v515 = vpack.c.b16 %v460, %v459
      %v516 = vpack.c.b16 %v462, %v461
      %v517 = vpack.c.b16 %v464, %v463
      %v518 = vpack.c.b16 %v466, %v465
      %v519 = vpack.c.b16 %v468, %v467
      %v520 = vpack.c.b16 %v470, %v469
      %v521 = vpack.c.b16 %v472, %v471
      %v522 = vpack.c.b16 %v474, %v473
      %v523 = vpack.c.b16 %v476, %v475
      %v524 = vpack.c.b16 %v478, %v477
      %v525 = vpack.c.b16 %v480, %v479
      %v526 = vpack.c.b16 %v482, %v481
      %v527 = vpack.c.b16 %v484, %v483
      %v528 = vpack.c.b16 %v486, %v485
      %v529 = vpack.c.b16 %v488, %v487
      %v530 = vpack.c.b16 %v490, %v489
      %v531 = vpack.c.b16 %v492, %v491
      %v532 = vpack.c.b16 %v494, %v493
      %v533 = vpack.c.b16 %v496, %v495
      %v534 = vpack.c.b16 %v498, %v497
      %v535 = vpack.c.b16 %v500, %v499
      %v536 = vpack.c.b16 %v502, %v501
      %v537 = vpack.c.b16 %v504, %v503
      %v538 = vpack.c.b16 %v506, %v505
      %vm539 = vcmask 261120
      %v541 = vsel %vm539, %v292, 0
      %v544 = vsel %vm539, %v507, 0
      %v547 = vsel %vm539, %v508, 0
      %v550 = vsel %vm539, %v509, 0
      %v553 = vsel %vm539, %v510, 0
      %v556 = vsel %vm539, %v511, 0
      %v559 = vsel %vm539, %v512, 0
      %v562 = vsel %vm539, %v513, 0
      %v565 = vsel %vm539, %v514, 0
      %v568 = vsel %vm539, %v515, 0
      %v571 = vsel %vm539, %v516, 0
      %v574 = vsel %vm539, %v517, 0
      %v577 = vsel %vm539, %v518, 0
      %v580 = vsel %vm539, %v519, 0
      %v583 = vsel %vm539, %v520, 0
      %v586 = vsel %vm539, %v521, 0
      %v589 = vsel %vm539, %v522, 0
      %v592 = vsel %vm539, %v523, 0
      %v595 = vsel %vm539, %v524, 0
      %v598 = vsel %vm539, %v525, 0
      %v601 = vsel %vm539, %v526, 0
      %v604 = vsel %vm539, %v527, 0
      %v607 = vsel %vm539, %v528, 0
      %v610 = vsel %vm539, %v529, 0
      %v613 = vsel %vm539, %v530, 0
      %v616 = vsel %vm539, %v531, 0
      %v619 = vsel %vm539, %v532, 0
      %v622 = vsel %vm539, %v533, 0
      %v625 = vsel %vm539, %v534, 0
      %v628 = vsel %vm539, %v535, 0
      %v631 = vsel %vm539, %v536, 0
      %v634 = vsel %vm539, %v537, 0
      %v637 = vsel %vm539, %v538, 0
      %639 = vmatprep.subr.bf16.mxu0 0
      %640 = vmatpush1.bf16.xpose.msra.mxu0 %v544
      %641 = vmatprep.subr.bf16.mxu0 0
      %642 = vmatpush1.bf16.xpose.msra.mxu0 %v547
      %643 = vmatprep.subr.bf16.mxu0 0
      %644 = vmatpush1.bf16.xpose.msra.mxu0 %v550
      %645 = vmatprep.subr.bf16.mxu0 0
      %646 = vmatpush1.bf16.xpose.msra.mxu0 %v553
      %647 = vmatprep.subr.bf16.mxu0 0
      %648 = vmatpush1.bf16.xpose.msra.mxu0 %v556
      %649 = vmatprep.subr.bf16.mxu0 0
      %650 = vmatpush1.bf16.xpose.msra.mxu0 %v559
      %651 = vmatprep.subr.bf16.mxu0 0
      %652 = vmatpush1.bf16.xpose.msra.mxu0 %v562
      %653 = vmatprep.subr.bf16.mxu0 0
      %654 = vmatpush1.bf16.xpose.msra.mxu0 %v565
      %655 = vmatprep.subr.bf16.mxu0 0
      %656 = vmatpush1.bf16.xpose.msra.mxu0 %v568
      %657 = vmatprep.subr.bf16.mxu0 0
      %658 = vmatpush1.bf16.xpose.msra.mxu0 %v571
      %659 = vmatprep.subr.bf16.mxu0 0
      %660 = vmatpush1.bf16.xpose.msra.mxu0 %v574
      %661 = vmatprep.subr.bf16.mxu0 0
      %662 = vmatpush1.bf16.xpose.msra.mxu0 %v577
      %663 = vmatprep.subr.bf16.mxu0 0
      %664 = vmatpush1.bf16.xpose.msra.mxu0 %v580
      %665 = vmatprep.subr.bf16.mxu0 0
      %666 = vmatpush1.bf16.xpose.msra.mxu0 %v583
      %667 = vmatprep.subr.bf16.mxu0 0
      %668 = vmatpush1.bf16.xpose.msra.mxu0 %v586
      %669 = vmatprep.subr.bf16.mxu0 0
      %670 = vmatpush1.bf16.xpose.msra.mxu0 %v589
      %671 = vmatprep.mubr.bf16.mxu0 0
      %672 = vmatmul.mubr.bf16.gmra.mrb[0].mxu0 %v541
      %v673 = vpop.f32.mrb[0].mxu0
      %v674 = vadd.f32 %v362, %v673
      %v675 = vpop.f32.mrb[0].mxu0
      %v676 = vadd.f32 %v366, %v675
      %v677 = vpop.f32.mrb[0].mxu0
      %v678 = vpop.f32.mrb[0].mxu0
      %679 = vdwg.mxu0
      %680 = vmatprep.subr.bf16.mxu0 0
      %681 = vmatpush1.bf16.xpose.msra.mxu0 %v592
      %682 = vmatprep.subr.bf16.mxu0 0
      %683 = vmatpush1.bf16.xpose.msra.mxu0 %v595
      %684 = vmatprep.subr.bf16.mxu0 0
      %685 = vmatpush1.bf16.xpose.msra.mxu0 %v598
      %686 = vmatprep.subr.bf16.mxu0 0
      %687 = vmatpush1.bf16.xpose.msra.mxu0 %v601
      %688 = vmatprep.subr.bf16.mxu0 0
      %689 = vmatpush1.bf16.xpose.msra.mxu0 %v604
      %690 = vmatprep.subr.bf16.mxu0 0
      %691 = vmatpush1.bf16.xpose.msra.mxu0 %v607
      %692 = vmatprep.subr.bf16.mxu0 0
      %693 = vmatpush1.bf16.xpose.msra.mxu0 %v610
      %694 = vmatprep.subr.bf16.mxu0 0
      %695 = vmatpush1.bf16.xpose.msra.mxu0 %v613
      %696 = vmatprep.subr.bf16.mxu0 0
      %697 = vmatpush1.bf16.xpose.msra.mxu0 %v616
      %698 = vmatprep.subr.bf16.mxu0 0
      %699 = vmatpush1.bf16.xpose.msra.mxu0 %v619
      %700 = vmatprep.subr.bf16.mxu0 0
      %701 = vmatpush1.bf16.xpose.msra.mxu0 %v622
      %702 = vmatprep.subr.bf16.mxu0 0
      %703 = vmatpush1.bf16.xpose.msra.mxu0 %v625
      %704 = vmatprep.subr.bf16.mxu0 0
      %705 = vmatpush1.bf16.xpose.msra.mxu0 %v628
      %706 = vmatprep.subr.bf16.mxu0 0
      %707 = vmatpush1.bf16.xpose.msra.mxu0 %v631
      %708 = vmatprep.subr.bf16.mxu0 0
      %709 = vmatpush1.bf16.xpose.msra.mxu0 %v634
      %710 = vmatprep.subr.bf16.mxu0 0
      %711 = vmatpush1.bf16.xpose.msra.mxu0 %v637
      %712 = vmatprep.mubr.bf16.mxu0 0
      %713 = vmatmul.mubr.bf16.gmra.mrb[0].mxu0 %v541
      %v714 = vpop.f32.mrb[0].mxu0
      %v715 = vadd.f32 %v370, %v714
      %v716 = vpop.f32.mrb[0].mxu0
      %v717 = vadd.f32 %v374, %v716
      %v718 = vpop.f32.mrb[0].mxu0
      %v719 = vpop.f32.mrb[0].mxu0
      %720 = vdwg.mxu0
      %s721 = smul.u32 %s20, 512
      %v722 = vlaneseq
      %v723 = vand.u32 %v722, 127
      %v724 = vadd.s32 %v723, 128
      %v725 = vadd.s32 %v723, 256
      %v726 = vadd.s32 %v723, 384
      %v727 = vstv %s721
      %v728 = vadd.s32 %v727, %v723
      %v729 = vadd.s32 %v727, %v724
      %v730 = vadd.s32 %v727, %v725
      %v731 = vadd.s32 %v727, %v726
      %vm732 = vcmp.lt.s32.totalorder %v728, 1000
      %vm733 = vcmp.lt.s32.totalorder %v729, 1000
      %vm734 = vcmp.lt.s32.totalorder %v730, 1000
      %vm735 = vcmp.lt.s32.totalorder %v731, 1000
      %v736 = vsel %vm732, %v674, -inf
      %v737 = vsel %vm733, %v676, -inf
      %v738 = vsel %vm734, %v715, -inf
      %v739 = vsel %vm735, %v717, -inf
      %v740 = vld [vmem:[#allocation2] sm:$0xff]
      %v741 = vmax.f32 %v736, %v737
      %v742 = vmax.f32 %v738, %v739
      %v743 = vmax.f32 %v741, %v742
      %744 = vmax.xlane.f32.xlu0 %v743
      %v745 = vpop.xlane.xlu0 %744
      %v746 = vmax.f32 %v740, %v745
      %v747 = vld [vmem:[#allocation3] sm:$0xff]
      %v748 = vsub.f32 %v740, %v746
      %v749 = vmul.f32 %v748, 1.442695
      %v750 = vpow.pop %v749
      %v751 = vmul.f32 %v747, %v750
      %753 = vset.pattern.permute.xlu0 0
      %754 = vperm.xlu0 %753, %v746
      %v755 = vpop.permute.xlu0 %754
      %v757 = vsub.f32 %v736, %v755
      %v758 = vsub.f32 %v737, %v755
      %v759 = vsub.f32 %v738, %v755
      %v760 = vsub.f32 %v739, %v755
      %v761 = vmul.f32 %v757, 1.442695
      %v762 = vpow.pop %v761
      %v763 = vmul.f32 %v758, 1.442695
      %v764 = vpow.pop %v763
      %v765 = vmul.f32 %v759, 1.442695
      %v766 = vpow.pop %v765
      %v767 = vmul.f32 %v760, 1.442695
      %v768 = vpow.pop %v767
      %v769 = vadd.f32 %v762, %v764
      %v770 = vadd.f32 %v769, %v766
      %v771 = vadd.f32 %v770, %v768
      %772 = vadd.xlane.f32.xlu0 %v771
      %v773 = vpop.xlane.xlu0 %772
      %v774 = vadd.f32 %v751, %v773
      %vm775 = vcmask 7168
      %776 = vst.msk [vmem:[#allocation3] sm:$0xff] %vm775, %v774
      %777 = vst.msk [vmem:[#allocation2] sm:$0xff] %vm775, %v746
      %v778 = vld [vmem:[%s278] sm:$0xff]
      %779 = vset.pattern.permute.xlu0 0
      %780 = vperm.xlu0 %779, %v778
      %v781 = vpop.permute.xlu0 %780
      %vm782 = vcmp.eq.s32.totalorder %v728, %v781
      %vm783 = vcmp.eq.s32.totalorder %v729, %v781
      %vm784 = vcmp.eq.s32.totalorder %v730, %v781
      %vm785 = vcmp.eq.s32.totalorder %v731, %v781
      %v786 = vld [vmem:[#allocation4] sm:$0xff]
      %v787 = vsel %vm782, %v736, 0.0
      %v788 = vsel %vm783, %v737, 0.0
      %v789 = vsel %vm784, %v738, 0.0
      %v790 = vsel %vm785, %v739, 0.0
      %v791 = vadd.f32 %v787, %v788
      %v792 = vadd.f32 %v791, %v789
      %v793 = vadd.f32 %v792, %v790
      %794 = vadd.xlane.f32.xlu0 %v793
      %v795 = vpop.xlane.xlu0 %794
      %v796 = vadd.f32 %v786, %v795
      %797 = vst.msk [vmem:[#allocation4] sm:$0xff] %vm775, %v796
      %p798 = scmp.eq.s32.totalorder %s20, 1
      // Predicated region
      $region41: #{tpu_custom_call.1} parent=35 // pred_check
        %p799 = pneg %p798
      $region42: #{tpu_custom_call.1} parent=35 // pred_check_branch
        %801 = sbr.rel (%p799) target = $region44
      $region43: #{tpu_custom_call.1} parent=35 // pred_region
        %v802 = vld [vmem:[#allocation2] sm:$0xff]
        %v803 = vld [vmem:[#allocation3] sm:$0xff]
        %v804 = vlog2.pop %v803
        %v805 = vmul.f32 %v804, 0.6931472
        %v806 = vadd.f32 %v802, %v805
        %v807 = vld [vmem:[#allocation4] sm:$0xff]
        %v808 = vsub.f32 %v806, %v807
        %vm809 = vcmp.eq.s32.totalorder %v778, 4294967196
        %v810 = vsel %vm809, 0.0, %v808
        %811 = vst.msk [vmem:[%s282] sm:$0xff] %vm775, %v810
      $region44: #{tpu_custom_call.1} parent=35 // pred_fallthru
        _
      %p812 = scmp.lt.s32.totalorder %s19, 1
      %s813 = scalar_select %p812, %s19, 1
      %s814 = smul.addr %s813, 8
      %s815 = scalar_lea.vmem %s4, %s814
      // Predicated region
      $region45: #{tpu_custom_call.1} parent=35 // pred_check
        %p816 = pneg %p149
      $region46: #{tpu_custom_call.1} parent=35 // pred_check_branch
        %818 = sbr.rel (%p816) target = $region48
      $region47: #{tpu_custom_call.1} parent=35 // pred_region
        _
      $region48: #{tpu_custom_call.1} parent=35 // pred_fallthru
        _
    $region36: #{tpu_custom_call.1} parent=5 // pred_fallthru
      _
    %p819 = scmp.le.s32.totalorder 2, %s10
    // Predicated region
    $region49: #{tpu_custom_call.1} parent=5 // pred_check
      %p820 = pneg %p819
    $region50: #{tpu_custom_call.1} parent=5 // pred_check_branch
      %822 = sbr.rel (%p820) target = $region52
    $region51: #{tpu_custom_call.1} parent=5 // pred_region
      %s823 = ssub.s32 %s10, 2
      // Predicated region
      $region53: #{tpu_custom_call.1} parent=51 // pred_check
        %p824 = pneg %p155
      $region54: #{tpu_custom_call.1} parent=51 // pred_check_branch
        %826 = sbr.rel (%p824) target = $region56
      $region55: #{tpu_custom_call.1} parent=51 // pred_region
        %p827 = scmp.lt.s32.totalorder %s21, 1
        %s828 = scalar_select %p827, %s21, 1
        %s829 = smul.addr %s828, 8
        %s830 = scalar_lea.vmem %s4, %s829
      $region56: #{tpu_custom_call.1} parent=51 // pred_fallthru
        _
    $region52: #{tpu_custom_call.1} parent=5 // pred_fallthru
      _
  $region6: #{tpu_custom_call.1} parent=0 // loop_footer
    %s14 = sadd.s32 1, %s10
  $region7: #{tpu_custom_call.1} parent=0 // loop_footer_branch
    %9 = sbr.rel target = $region3
  $region8: #{tpu_custom_call.1} parent=0 // loop_exit
    _

</llo_original>
